<compile_context>
chip_gen: v7x
topology: tpu7x:2x2x1
jax: 0.10.0
libtpu: 0.0.40
codegen_flags: <defaults>
</compile_context>

<pallas_src>
import functools

import jax
import jax.numpy as jnp
import numpy as np
from jax.experimental import pallas as pl
from jax.experimental.pallas import tpu as pltpu


def _round_up(x, mult):
    return ((int(x) + mult - 1) // mult) * mult


def _default_row_splits():
    """2 row-blocks (one per TensorCore) on v7x-class chips, else 1."""
    try:
        kind = jax.devices()[0].device_kind.lower()
    except Exception:
        return 1
    return 2 if "7" in kind else 1


def _make_gram_kernel(split_lhs):
    """Kernel accumulating one class gram per m-tile directly into out_ref."""

    def _accumulate(first_ref, out_ref, lhs, rhs):
        s = pl.program_id(1)

        @pl.when(first_ref[s] == 1)          # first tile of this class' group
        def _init():
            out_ref[...] = jnp.zeros_like(out_ref)

        # (Pr, bm) x (bm, P) -> (Pr, P), f32 accumulation on the MXU.
        out_ref[...] += jax.lax.dot_general(
            lhs, rhs,
            dimension_numbers=(((1,), (1,)), ((), ())),
            preferred_element_type=jnp.float32)[None, :, :]

    if split_lhs:
        def kernel(cls_ref, first_ref, wl_ref, w_ref, out_ref):
            del cls_ref  # only used by the index_maps
            _accumulate(first_ref, out_ref, wl_ref[...], w_ref[...])
    else:
        def kernel(cls_ref, first_ref, w_ref, out_ref):
            del cls_ref
            _accumulate(first_ref, out_ref, w_ref[...], w_ref[...])
    return kernel


def class_grams(Wg, cls_tile, first_tile, k, P, bm, row_splits):
    """Return (k, P, P) f32 grams, grams[j] = W Pi_j W^T (class-grouped W)."""
    _, M_pad = Wg.shape
    n_m = M_pad // bm
    R = max(1, int(row_splits))
    Pr = P // R
    split_lhs = R > 1

    in_specs = [pl.BlockSpec((P, bm), lambda r, s, cls, first: (0, s))]
    if split_lhs:
        # Row block of W for the LHS; full W tile stays the RHS.
        in_specs = [pl.BlockSpec((Pr, bm), lambda r, s, cls, first: (r, s))] + in_specs

    # Explicit VMEM budget (double-buffered inputs + resident output block).
    in_bytes = 2 * 4 * P * bm + (2 * 4 * Pr * bm if split_lhs else 0)
    out_bytes = 2 * 4 * Pr * P
    vmem_limit = int(min(64 << 20, max(32 << 20, 4 * (in_bytes + out_bytes))))

    operands = (cls_tile, first_tile) + ((Wg, Wg) if split_lhs else (Wg,))
    return pl.pallas_call(
        _make_gram_kernel(split_lhs),
        out_shape=jax.ShapeDtypeStruct((k, P, P), jnp.float32),
        grid_spec=pltpu.PrefetchScalarGridSpec(
            num_scalar_prefetch=2,                 # cls_tile, first_tile (SMEM)
            grid=(R, n_m),
            in_specs=in_specs,
            # Data-dependent output block: class of the current m-tile.
            out_specs=pl.BlockSpec((1, Pr, P),
                                   lambda r, s, cls, first: (cls[s], r, 0)),
        ),
        compiler_params=pltpu.CompilerParams(
            dimension_semantics=("parallel", "arbitrary"),
            vmem_limit_bytes=vmem_limit),
    )(*operands)


def mcr2_forward(X, Y, num_classes, gam1=1.0, gam2=1.0, eps=0.01,
                 bm=None, row_splits=None):
    """Mirrors MaximalCodingRateReduction.forward (empirical losses)."""
    X = jnp.asarray(X, jnp.float32)
    m, p = X.shape
    k = int(num_classes)

    # ---- host-side class grouping (labels must be concrete) ----
    # TODO(synk): this layout step uses host numpy (bincount/argsort), so the
    # wrapper is eager-only; a jit-able variant needs static per-class
    # capacities or an upper-bounded MoE-style grid.
    y_np = np.asarray(jax.device_get(Y)).astype(np.int64).reshape(-1)
    if y_np.shape[0] != m:
        raise ValueError("Y must have one label per row of X")
    if (y_np < 0).any() or (y_np >= k).any():
        # sum_j W Pi_j W^T == W W^T only holds when every label is in range.
        raise ValueError("labels must lie in [0, num_classes)")

    counts = np.bincount(y_np, minlength=k)[:k].astype(np.int64)

    P = _round_up(p, 128)                               # lane-dense (P, P) grams
    if bm is None:                                      # m-tile: big enough to
        bm = int(min(1024, max(256, _round_up(max(1, int(counts.max())), 128))))

    caps = np.maximum(bm, ((counts + bm - 1) // bm) * bm)   # per-class capacity
    offsets = np.concatenate([[0], np.cumsum(caps)])[:-1]
    M_pad = int(caps.sum())
    n_m = M_pad // bm

    tiles_per_class = (caps // bm).astype(np.int64)
    cls_tile = np.repeat(np.arange(k, dtype=np.int32), tiles_per_class)
    first_tile = np.zeros(n_m, np.int32)
    first_tile[np.concatenate([[0], np.cumsum(tiles_per_class)])[:-1]] = 1

    # Column position of each sample: class offset + rank within its class.
    order = np.argsort(y_np, kind="stable")
    class_starts = np.concatenate([[0], np.cumsum(counts)])[:-1]
    ranks_sorted = np.arange(m) - class_starts[y_np[order]]
    cols = np.empty(m, np.int64)
    cols[order] = offsets[y_np[order]] + ranks_sorted

    # W = X.T scattered into class-contiguous, zero-padded columns (f32).
    Wg = jnp.zeros((P, M_pad), jnp.float32)
    Wg = Wg.at[:p, jnp.asarray(cols)].set(X.T)

    if row_splits is None:
        row_splits = _default_row_splits()

    grams_pad = class_grams(Wg, jnp.asarray(cls_tile, jnp.int32),
                            jnp.asarray(first_tile, jnp.int32),
                            k, P, bm, row_splits)       # (k, P, P) f32

    grams = grams_pad[:, :p, :p]                        # drop feature padding
    # Pi[j] partition the samples (labels validated above), so the full gram
    # W W^T is the sum of the class grams.
    gram_full = jnp.sum(grams, axis=0)

    I = jnp.eye(p, dtype=jnp.float32)
    trPi = jnp.asarray(counts, jnp.float32) + 1e-8      # trace(Pi[j])

    # One batched slogdet for the full gram + the k class grams.
    # TODO(synk): the p x p logdet (LU) has no clean Pallas equivalent; it
    # stays as jnp.linalg.slogdet glue on the kernel's gram outputs.
    scal_full = gam1 * p / (m * eps)
    scal_j = p / (trPi * eps)                           # (k,)
    mats = jnp.concatenate(
        [(I + scal_full * gram_full)[None],
         I[None, :, :] + scal_j[:, None, None] * grams], axis=0)
    _, logdets = jnp.linalg.slogdet(mats)

    discrimn_loss_empi = logdets[0] / 2.0
    compress_loss_empi = jnp.sum(logdets[1:] * trPi / m) / 2.0
    # (theoretical losses in the PyTorch forward are dead code; dropped.)
    total_loss_empi = gam2 * -discrimn_loss_empi + compress_loss_empi
    # TODO(synk): forward only; no custom VJP is provided for the gram kernel.
    return total_loss_empi, discrimn_loss_empi, compress_loss_empi


def _mcr2_reference(X, Y, num_classes, gam1=1.0, gam2=1.0, eps=0.01):
    """Pure-JAX f32 reference mirroring the PyTorch module."""
    X = X.astype(jnp.float32)
    m, p = X.shape
    W = X.T
    I = jnp.eye(p, dtype=jnp.float32)
    hi = jax.lax.Precision.HIGHEST
    scalar = p / (m * eps)
    _, ld = jnp.linalg.slogdet(I + gam1 * scalar * jnp.dot(W, W.T, precision=hi))
    discrimn = ld / 2.0
    onehot = jax.nn.one_hot(Y, num_classes, dtype=jnp.float32)  # (m, k)
    compress = 0.0
    for j in range(num_classes):
        pij = onehot[:, j]
        trPi = jnp.sum(pij) + 1e-8
        s = p / (trPi * eps)
        Gj = jnp.dot(W * pij[None, :], W.T, precision=hi)
        _, ldj = jnp.linalg.slogdet(I + s * Gj)
        compress = compress + ldj * trPi / m
    compress = compress / 2.0
    total = gam2 * -discrimn + compress
    return total, discrimn, compress


if __name__ == "__main__":
    key = jax.random.PRNGKey(0)
    k1, k2 = jax.random.split(key)

    m, p, num_classes = 16, 32, 4                          # samples, features, classes
    X = jax.random.normal(k1, (m, p), dtype=jnp.float32)   # features (batch-major)
    Y = jax.random.randint(k2, (m,), 0, num_classes)       # integer labels

    out = mcr2_forward(X, Y, num_classes)
    out = jax.block_until_ready(out)

    ref = _mcr2_reference(X, Y, num_classes)
    np.testing.assert_allclose(np.asarray(out), np.asarray(ref),
                               rtol=1e-3, atol=1e-2)
    print("KERNEL_OK")
</pallas_src>

<mosaic_0001>
module attributes {stable_mosaic.version = 11 : i64} {
  func.func @kernel(%arg0: i32, %arg1: i32, %arg2: memref<4xi32, #tpu.memory_space<smem>>, %arg3: memref<4xi32, #tpu.memory_space<smem>>, %arg4: memref<128x256xf32, #tpu.memory_space<vmem>>, %arg5: memref<1x128x128xf32, #tpu.memory_space<vmem>>) attributes {dimension_semantics = [#tpu.dimension_semantics<parallel>, #tpu.dimension_semantics<arbitrary>], iteration_bounds = array<i64: 1, 4>, scalar_prefetch = 2 : i64, scratch_operands = 0 : i64, tpu.core_type = #tpu.core_type<tc>, window_params = [{transform_indices = @transform_0, window_bounds = array<i64: 128, 256>}, {transform_indices = @transform_1, window_bounds = array<i64: 1, 128, 128>}]} {
    %c0 = arith.constant 0 : index
    %c0_0 = arith.constant 0 : index
    %0 = vector.load %arg4[%c0, %c0_0] : memref<128x256xf32, #tpu.memory_space<vmem>>, vector<128x256xf32>
    %c0_1 = arith.constant 0 : index
    %c0_2 = arith.constant 0 : index
    %1 = vector.load %arg4[%c0_1, %c0_2] : memref<128x256xf32, #tpu.memory_space<vmem>>, vector<128x256xf32>
    %2 = arith.index_cast %arg1 : i32 to index
    %3 = memref.load %arg3[%2] : memref<4xi32, #tpu.memory_space<smem>>
    %c1_i32 = arith.constant 1 : i32
    %4 = arith.cmpi eq, %3, %c1_i32 : i32
    %5 = arith.extui %4 : i1 to i32
    %c0_i32 = arith.constant 0 : i32
    %6 = arith.cmpi ne, %5, %c0_i32 : i32
    scf.if %6 {
      %cst_9 = arith.constant 0.000000e+00 : f32
      %12 = vector.broadcast %cst_9 : f32 to vector<1x128x128xf32>
      %c0_10 = arith.constant 0 : index
      %c0_11 = arith.constant 0 : index
      %c0_12 = arith.constant 0 : index
      %13 = vector.load %arg5[%c0_10, %c0_11, %c0_12] : memref<1x128x128xf32, #tpu.memory_space<vmem>>, vector<1x128x128xf32>
      tpu.vector_store %arg5[%c0_10, %c0_11, %c0_12], %12 {strides = array<i32>} : memref<1x128x128xf32, #tpu.memory_space<vmem>>, vector<1x128x128xf32>,
    } else {
    }
    %c0_3 = arith.constant 0 : index
    %c0_4 = arith.constant 0 : index
    %c0_5 = arith.constant 0 : index
    %7 = vector.load %arg5[%c0_3, %c0_4, %c0_5] : memref<1x128x128xf32, #tpu.memory_space<vmem>>, vector<1x128x128xf32>
    %cst = arith.constant dense<0.000000e+00> : vector<128x128xf32>
    %8 = tpu.matmul %0, %1, %cst {dimension_numbers = #tpu.dot_dimension_numbers<[1], [1], [0], [0], [0, 0, 1, 0], [], []>} : vector<128x256xf32>, vector<128x256xf32>, vector<128x128xf32> -> vector<128x128xf32>
    %9 = vector.shape_cast %8 : vector<128x128xf32> to vector<1x128x128xf32>
    %10 = arith.addf %7, %9 : vector<1x128x128xf32>
    %c0_6 = arith.constant 0 : index
    %c0_7 = arith.constant 0 : index
    %c0_8 = arith.constant 0 : index
    %11 = vector.load %arg5[%c0_6, %c0_7, %c0_8] : memref<1x128x128xf32, #tpu.memory_space<vmem>>, vector<1x128x128xf32>
    tpu.vector_store %arg5[%c0_6, %c0_7, %c0_8], %10 {strides = array<i32>} : memref<1x128x128xf32, #tpu.memory_space<vmem>>, vector<1x128x128xf32>,
    return
  }
  func.func @transform_0(%arg0: i32, %arg1: i32, %arg2: memref<4xi32, #tpu.memory_space<smem>>, %arg3: memref<4xi32, #tpu.memory_space<smem>>) -> (i32, i32) {
    %c0_i32 = arith.constant 0 : i32
    %c0_i32_0 = arith.constant 0 : i32
    return %c0_i32, %arg1 : i32, i32
  }
  func.func @transform_1(%arg0: i32, %arg1: i32, %arg2: memref<4xi32, #tpu.memory_space<smem>>, %arg3: memref<4xi32, #tpu.memory_space<smem>>) -> (i32, i32, i32) {
    %0 = arith.index_cast %arg1 : i32 to index
    %1 = memref.load %arg2[%0] : memref<4xi32, #tpu.memory_space<smem>>
    %c0_i32 = arith.constant 0 : i32
    %c0_i32_0 = arith.constant 0 : i32
    return %1, %arg0, %c0_i32 : i32, i32, i32
  }
}

</mosaic_0001>

<llo_original>
// kernel: tpu_custom_call.1
$region0: #{tpu_custom_call.1}
  #allocation0 [shape = 'u32[]', space=smem, size = 0x4, offset = 0x4, fixed_abs, tag = 'smem constant byte address 0x4 - core index']
  #allocation1 [shape = 'u32[144,128]{1,0:T(1,128)}', space=vmem, size = 0x12000, scoped, tag = 'internal scratch']
  #allocation2 [shape = 's32[1]{0}', space=sflag, size = 0x4, scoped, tag = 'scoped memory for tpu_custom_call.1']
  #allocation3 [shape = 'u8[512]{0}', space=smem, size = 0x200, scoped, tag = 'prefetched SMEM operand 0']
  #allocation4 [shape = 'u8[512]{0}', space=smem, size = 0x200, scoped, tag = 'prefetched SMEM operand 1']
  %s0 = inlined_call_operand.hbm [shape: s32[4], index: 0, kind: input, shape index: {}]
  %s1 = inlined_call_operand.vmem [shape: s32[4], index: 1, kind: input, shape index: {}]
  %s2 = inlined_call_operand.hbm [shape: f32[128,1024], index: 2, kind: input, shape index: {}]
  %s3 = inlined_call_operand.hbm [shape: f32[4,128,128], index: 3, kind: output, shape index: {}]
  %s4 = sld [smem:[#allocation0]]
  $region45: #{tpu_custom_call.1} parent=0
    _
  %s6 = ssub.s32 1, %s4
  %s7 = scalar_select 0, %s6, %s4
  %9 = dma.hbm_to_smem %s0, 16, [#allocation3], [#allocation2]
  %s10 = sshll.u32 %s1, 4
  %s11 = int_to_ptr.vmem [resolvable:$true] %s10
  %13 = dma.vmem_to_smem %s11, 16, [#allocation4], [#allocation2]
  %14 = dma.done [#allocation2], 32
  %15 = sfence
  $region1: #{tpu_custom_call.1} parent=0
    #allocation5 [shape = 'u8[262144]{0}', space=vmem, size = 0x40000, scoped, tag = 'input window, operand 2']
    #allocation6 [shape = 's32[2]{0}', space=sflag, size = 0x8, scoped, tag = 'scoped memory for tpu_custom_call.1']
    #allocation7 [shape = 's32[2]{0}', space=sflag, size = 0x8, scoped, tag = 'scoped memory for tpu_custom_call.1']
    #allocation8 [shape = 'u8[131072]{0}', space=vmem, size = 0x20000, scoped, tag = 'output window, operand 0']
    %16 = vsyncpa [#allocation6], 0
    %s17 = scalar_lea.sflag [#allocation6], 1
    %18 = vsyncpa %s17, 0
    %19 = vsyncpa [#allocation7], 0
    %s20 = scalar_lea.sflag [#allocation7], 1
    %21 = vsyncpa %s20, 0
    loop: start=0, step=1, limit=6
    $region2: #{tpu_custom_call.1} parent=1 // loop_pre_header
      _
    $region3: #{tpu_custom_call.1} parent=1 // loop_header
      %s23 = sphi 0, %s27
      %p24 = scmp.ge.s32.totalorder %s23, 6
      %s30 = sphi 0, %s42
      %s31 = sphi 0, %s38
      %s32 = sphi 0, %s30
      %s33 = sphi 0, %s31
      %s34 = sphi 0, %s32
      %s35 = sphi 0, %s33
      %s45 = sphi 0, %s47
      %s48 = sphi 0, %s45
      %s49 = sphi 0, %s48
      %s65 = sphi 0, %s49
      %s75 = sphi 0, %s77
      %s78 = sphi 0, %s75
      %s79 = sphi 0, %s78
      %s95 = sphi 0, %s79
    $region4: #{tpu_custom_call.1} parent=1 // loop_header_branch
      %26 = sbr.rel (%p24) target = $region8
    $region5: #{tpu_custom_call.1} parent=1 // loop_body
      %s28 = ssub.s32 %s23, 1
      %s29 = ssub.s32 %s23, 2
      %s36 = sadd.s32 1, %s31
      %p37 = scmp.ge.s32.totalorder %s36, 4
      %s38 = scalar_select %p37, 0, %s36
      %s39 = sadd.s32 1, %s30
      %s40 = scalar_select %p37, %s39, %s30
      %p41 = scmp.ge.s32.totalorder %s40, 1
      %s42 = scalar_select %p41, 0, %s40
      %s43 = ssub.s32 %s31, %s38
      %p44 = scmp.eq.s32.totalorder %s43, 0
      %s46 = sadd.s32 %s45, 1
      %s47 = scalar_select %p44, %s45, %s46
      %p50 = pneg %p44
      %p51 = scmp.eq.s32.totalorder %s23, 3
      %p52 = por %p50, %p51
      %p53 = scmp.ne.s32.totalorder %s45, %s48
      %p54 = scmp.eq.s32.totalorder %s23, 0
      %p55 = por %p53, %p54
      %p56 = scmp.ne.s32.totalorder %s45, %s48
      %p57 = scmp.eq.s32.totalorder %s28, 3
      %p58 = por %p56, %p57
      %p59 = scmp.ne.s32.totalorder %s48, %s49
      %p60 = scmp.eq.s32.totalorder %s28, 0
      %p61 = por %p59, %p60
      %p62 = scmp.ne.s32.totalorder %s48, %s49
      %p63 = scmp.eq.s32.totalorder %s29, 3
      %p64 = por %p62, %p63
      %p66 = scmp.ne.s32.totalorder %s49, %s65
      %p67 = scmp.eq.s32.totalorder %s29, 0
      %p68 = por %p66, %p67
      %s69 = sld [smem:[#allocation3 + %s31]]
      %s70 = sld [smem:[#allocation3 + %s38]]
      %s71 = ssub.s32 %s69, %s70
      %s72 = ssub.s32 %s30, %s42
      %s73 = sor.u32 %s71, %s72
      %p74 = scmp.eq.s32.totalorder %s73, 0
      %s76 = sadd.s32 %s75, 1
      %s77 = scalar_select %p74, %s75, %s76
      %p80 = pneg %p74
      %p81 = scmp.eq.s32.totalorder %s23, 3
      %p82 = por %p80, %p81
      %p83 = scmp.ne.s32.totalorder %s75, %s78
      %p84 = scmp.eq.s32.totalorder %s23, 0
      %p85 = por %p83, %p84
      %p86 = scmp.ne.s32.totalorder %s75, %s78
      %p87 = scmp.eq.s32.totalorder %s28, 3
      %p88 = por %p86, %p87
      %p89 = scmp.ne.s32.totalorder %s78, %s79
      %p90 = scmp.eq.s32.totalorder %s28, 0
      %p91 = por %p89, %p90
      %p92 = scmp.ne.s32.totalorder %s78, %s79
      %p93 = scmp.eq.s32.totalorder %s29, 3
      %p94 = por %p92, %p93
      %p96 = scmp.ne.s32.totalorder %s79, %s95
      %p97 = scmp.eq.s32.totalorder %s29, 0
      %p98 = por %p96, %p97
      %p99 = scmp.le.s32.totalorder 1, %s23
      %p100 = scmp.lt.s32.totalorder %s23, 5
      %p101 = pnand %p99, %p100
      %p102 = pneg %p101
      // Predicated region
      $region9: #{tpu_custom_call.1} parent=5 // pred_check
        _
      $region10: #{tpu_custom_call.1} parent=5 // pred_check_branch
        %104 = sbr.rel (%p101) target = $region12
      $region11: #{tpu_custom_call.1} parent=5 // pred_region
        %s105 = ssub.s32 %s23, 1
      $region12: #{tpu_custom_call.1} parent=5 // pred_fallthru
        _
      %p106 = scmp.lt.s32.totalorder %s23, 4
      // Predicated region
      $region13: #{tpu_custom_call.1} parent=5 // pred_check
        %p107 = pneg %p106
      $region14: #{tpu_custom_call.1} parent=5 // pred_check_branch
        %109 = sbr.rel (%p107) target = $region16
      $region15: #{tpu_custom_call.1} parent=5 // pred_region
        // Predicated region
        $region17: #{tpu_custom_call.1} parent=15 // pred_check
          %p110 = pneg %p55
        $region18: #{tpu_custom_call.1} parent=15 // pred_check_branch
          %112 = sbr.rel (%p110) target = $region20
        $region19: #{tpu_custom_call.1} parent=15 // pred_region
          %s113 = sand.u32 %s45, 1
          %s114 = scalar_lea.sflag [#allocation6], %s113
          %s115 = sand.u32 %s45, 1
          %s116 = smul.addr %s115, 256
          %s117 = scalar_lea.vmem [#allocation5], %s116
          %s118 = smul.u32 2, %s31
          %s120 = ssub.s32 4096, 4096
          %121 = vsyncadd %s114, %s120
          %s122 = smul.addr %s118, 128
          %s123 = scalar_lea.hbm %s2, %s122
          %s124 = sshll.u32 %s117, 4
          %s125 = int_to_ptr.vmem [resolvable:$true] %s124
          %130 = dma.hbm_to_vmem [thread:$0]  %s123, 4096, %s125, %s114, 1024, 256, 16
        $region20: #{tpu_custom_call.1} parent=15 // pred_fallthru
          _
      $region16: #{tpu_custom_call.1} parent=5 // pred_fallthru
        _
      %p131 = scmp.le.s32.totalorder 1, %s23
      %p132 = scmp.lt.s32.totalorder %s23, 5
      %p133 = pnand %p131, %p132
      %p134 = pneg %p133
      // Predicated region
      $region21: #{tpu_custom_call.1} parent=5 // pred_check
        _
      $region22: #{tpu_custom_call.1} parent=5 // pred_check_branch
        %136 = sbr.rel (%p133) target = $region24
      $region23: #{tpu_custom_call.1} parent=5 // pred_region
        %s137 = ssub.s32 %s23, 1
        %s138 = sand.u32 %s48, 1
        %s139 = scalar_lea.sflag [#allocation6], %s138
        %s140 = sand.u32 %s48, 1
        %s141 = smul.addr %s140, 256
        %s142 = scalar_lea.vmem [#allocation5], %s141
        // Predicated region
        $region25: #{tpu_custom_call.1} parent=23 // pred_check
          %p143 = pneg %p61
        $region26: #{tpu_custom_call.1} parent=23 // pred_check_branch
          %145 = sbr.rel (%p143) target = $region28
        $region27: #{tpu_custom_call.1} parent=23 // pred_region
          %146 = dma.done %s139, 4096
        $region28: #{tpu_custom_call.1} parent=23 // pred_fallthru
          _
        %s147 = sand.u32 %s48, 1
        %s148 = scalar_lea.sflag [#allocation6], %s147
        %s149 = sand.u32 %s48, 1
        %s150 = smul.addr %s149, 256
        %s151 = scalar_lea.vmem [#allocation5], %s150
        %p152 = pneg %p61
        %p153 = pneg %p58
        %p154 = pneg %p91
        %p155 = pneg %p88
        %s156 = sand.u32 %s78, 1
        %s157 = scalar_lea.sflag [#allocation7], %s156
        %s158 = sand.u32 %s78, 1
        %s159 = smul.addr %s158, 128
        %s160 = scalar_lea.vmem [#allocation8], %s159
        %s161 = smul.u32 2, %s33
        %s162 = sld [smem:[#allocation3 + %s33]]
        %s163 = smul.u32 16, %s32
        %v164 = vld [vmem:[%s142] sm:$0xff]
        %v165 = vld [vmem:[%s142 + $0x8] sm:$0xff]
        %v166 = vld [vmem:[%s142 + $0x10] sm:$0xff]
        %v167 = vld [vmem:[%s142 + $0x18] sm:$0xff]
        %v168 = vld [vmem:[%s142 + $0x20] sm:$0xff]
        %v169 = vld [vmem:[%s142 + $0x28] sm:$0xff]
        %v170 = vld [vmem:[%s142 + $0x30] sm:$0xff]
        %v171 = vld [vmem:[%s142 + $0x38] sm:$0xff]
        %v172 = vld [vmem:[%s142 + $0x40] sm:$0xff]
        %v173 = vld [vmem:[%s142 + $0x48] sm:$0xff]
        %v174 = vld [vmem:[%s142 + $0x50] sm:$0xff]
        %v175 = vld [vmem:[%s142 + $0x58] sm:$0xff]
        %v176 = vld [vmem:[%s142 + $0x60] sm:$0xff]
        %v177 = vld [vmem:[%s142 + $0x68] sm:$0xff]
        %v178 = vld [vmem:[%s142 + $0x70] sm:$0xff]
        %v179 = vld [vmem:[%s142 + $0x78] sm:$0xff]
        %v180 = vld [vmem:[%s142 + $0x80] sm:$0xff]
        %v181 = vld [vmem:[%s142 + $0x88] sm:$0xff]
        %v182 = vld [vmem:[%s142 + $0x90] sm:$0xff]
        %v183 = vld [vmem:[%s142 + $0x98] sm:$0xff]
        %v184 = vld [vmem:[%s142 + $0xa0] sm:$0xff]
        %v185 = vld [vmem:[%s142 + $0xa8] sm:$0xff]
        %v186 = vld [vmem:[%s142 + $0xb0] sm:$0xff]
        %v187 = vld [vmem:[%s142 + $0xb8] sm:$0xff]
        %v188 = vld [vmem:[%s142 + $0xc0] sm:$0xff]
        %v189 = vld [vmem:[%s142 + $0xc8] sm:$0xff]
        %v190 = vld [vmem:[%s142 + $0xd0] sm:$0xff]
        %v191 = vld [vmem:[%s142 + $0xd8] sm:$0xff]
        %v192 = vld [vmem:[%s142 + $0xe0] sm:$0xff]
        %v193 = vld [vmem:[%s142 + $0xe8] sm:$0xff]
        %v194 = vld [vmem:[%s142 + $0xf0] sm:$0xff]
        %v195 = vld [vmem:[%s142 + $0xf8] sm:$0xff]
        %s196 = sld [smem:[#allocation4 + %s33]]
        %p197 = scmp.eq.s32.totalorder %s196, 1
        // Predicated region
        $region29: #{tpu_custom_call.1} parent=23 // pred_check
          %p198 = pneg %p197
        $region30: #{tpu_custom_call.1} parent=23 // pred_check_branch
          %200 = sbr.rel (%p198) target = $region32
        $region31: #{tpu_custom_call.1} parent=23 // pred_region
          %201 = vst [vmem:[%s160] sm:$0xff] 0.0
          %202 = vst [vmem:[%s160 + $0x8] sm:$0xff] 0.0
          %203 = vst [vmem:[%s160 + $0x10] sm:$0xff] 0.0
          %204 = vst [vmem:[%s160 + $0x18] sm:$0xff] 0.0
          %205 = vst [vmem:[%s160 + $0x20] sm:$0xff] 0.0
          %206 = vst [vmem:[%s160 + $0x28] sm:$0xff] 0.0
          %207 = vst [vmem:[%s160 + $0x30] sm:$0xff] 0.0
          %208 = vst [vmem:[%s160 + $0x38] sm:$0xff] 0.0
          %209 = vst [vmem:[%s160 + $0x40] sm:$0xff] 0.0
          %210 = vst [vmem:[%s160 + $0x48] sm:$0xff] 0.0
          %211 = vst [vmem:[%s160 + $0x50] sm:$0xff] 0.0
          %212 = vst [vmem:[%s160 + $0x58] sm:$0xff] 0.0
          %213 = vst [vmem:[%s160 + $0x60] sm:$0xff] 0.0
          %214 = vst [vmem:[%s160 + $0x68] sm:$0xff] 0.0
          %215 = vst [vmem:[%s160 + $0x70] sm:$0xff] 0.0
          %216 = vst [vmem:[%s160 + $0x78] sm:$0xff] 0.0
        $region32: #{tpu_custom_call.1} parent=23 // pred_fallthru
          _
        %v217 = vld [vmem:[%s160] sm:$0xff]
        %v218 = vld [vmem:[%s160 + $0x8] sm:$0xff]
        %v219 = vld [vmem:[%s160 + $0x10] sm:$0xff]
        %v220 = vld [vmem:[%s160 + $0x18] sm:$0xff]
        %v221 = vld [vmem:[%s160 + $0x20] sm:$0xff]
        %v222 = vld [vmem:[%s160 + $0x28] sm:$0xff]
        %v223 = vld [vmem:[%s160 + $0x30] sm:$0xff]
        %v224 = vld [vmem:[%s160 + $0x38] sm:$0xff]
        %v225 = vld [vmem:[%s160 + $0x40] sm:$0xff]
        %v226 = vld [vmem:[%s160 + $0x48] sm:$0xff]
        %v227 = vld [vmem:[%s160 + $0x50] sm:$0xff]
        %v228 = vld [vmem:[%s160 + $0x58] sm:$0xff]
        %v229 = vld [vmem:[%s160 + $0x60] sm:$0xff]
        %v230 = vld [vmem:[%s160 + $0x68] sm:$0xff]
        %v231 = vld [vmem:[%s160 + $0x70] sm:$0xff]
        %v232 = vld [vmem:[%s160 + $0x78] sm:$0xff]
        %233 = vmatprep.subr.mxu0 %v165
        %234 = vmatpush1.xpose.msra.mxu0 %v164
        %235 = vmatprep.subr.mxu0 %v167
        %236 = vmatpush1.xpose.msra.mxu0 %v166
        %237 = vmatprep.subr.mxu0 %v169
        %238 = vmatpush1.xpose.msra.mxu0 %v168
        %239 = vmatprep.subr.mxu0 %v171
        %240 = vmatpush1.xpose.msra.mxu0 %v170
        %241 = vmatprep.subr.mxu0 %v173
        %242 = vmatpush1.xpose.msra.mxu0 %v172
        %243 = vmatprep.subr.mxu0 %v175
        %244 = vmatpush1.xpose.msra.mxu0 %v174
        %245 = vmatprep.subr.mxu0 %v177
        %246 = vmatpush1.xpose.msra.mxu0 %v176
        %247 = vmatprep.subr.mxu0 %v179
        %248 = vmatpush1.xpose.msra.mxu0 %v178
        %249 = vmatprep.subr.mxu0 %v181
        %250 = vmatpush1.xpose.msra.mxu0 %v180
        %251 = vmatprep.subr.mxu0 %v183
        %252 = vmatpush1.xpose.msra.mxu0 %v182
        %253 = vmatprep.subr.mxu0 %v185
        %254 = vmatpush1.xpose.msra.mxu0 %v184
        %255 = vmatprep.subr.mxu0 %v187
        %256 = vmatpush1.xpose.msra.mxu0 %v186
        %257 = vmatprep.subr.mxu0 %v189
        %258 = vmatpush1.xpose.msra.mxu0 %v188
        %259 = vmatprep.subr.mxu0 %v191
        %260 = vmatpush1.xpose.msra.mxu0 %v190
        %261 = vmatprep.subr.mxu0 %v193
        %262 = vmatpush1.xpose.msra.mxu0 %v192
        %263 = vmatprep.subr.mxu0 %v195
        %264 = vmatpush1.xpose.msra.mxu0 %v194
        %265 = vmatprep.subr.mxu0 0.0
        %266 = vmatpush1.xpose.msra.mxu0 0.0
        %267 = vmatprep.subr.mxu0 0.0
        %268 = vmatpush1.xpose.msra.mxu0 0.0
        %269 = vmatprep.subr.mxu0 0.0
        %270 = vmatpush1.xpose.msra.mxu0 0.0
        %271 = vmatprep.subr.mxu0 0.0
        %272 = vmatpush1.xpose.msra.mxu0 0.0
        %273 = vmatprep.subr.mxu0 0.0
        %274 = vmatpush1.xpose.msra.mxu0 0.0
        %275 = vmatprep.subr.mxu0 0.0
        %276 = vmatpush1.xpose.msra.mxu0 0.0
        %277 = vmatprep.subr.mxu0 0.0
        %278 = vmatpush1.xpose.msra.mxu0 0.0
        %279 = vmatprep.subr.mxu0 0.0
        %280 = vmatpush1.xpose.msra.mxu0 0.0
        %281 = vmatprep.subr.mxu0 0.0
        %282 = vmatpush1.xpose.msra.mxu0 0.0
        %283 = vmatprep.subr.mxu0 0.0
        %284 = vmatpush1.xpose.msra.mxu0 0.0
        %285 = vmatprep.subr.mxu0 0.0
        %286 = vmatpush1.xpose.msra.mxu0 0.0
        %287 = vmatprep.subr.mxu0 0.0
        %288 = vmatpush1.xpose.msra.mxu0 0.0
        %289 = vmatprep.subr.mxu0 0.0
        %290 = vmatpush1.xpose.msra.mxu0 0.0
        %291 = vmatprep.subr.mxu0 0.0
        %292 = vmatpush1.xpose.msra.mxu0 0.0
        %293 = vmatprep.subr.mxu0 0.0
        %294 = vmatpush1.xpose.msra.mxu0 0.0
        %295 = vmatprep.subr.mxu0 0.0
        %296 = vmatpush1.xpose.msra.mxu0 0.0
        %297 = vmatprep.mubr.f32.mxu0 %v165
        %298 = vmatmul.mubr.f32.gmra.mrb[0].mxu0 %v164
        %v299 = vpop.f32.mrb[0].mxu0
        %v300 = vadd.f32 0.0, %v299
        %v301 = vpop.f32.mrb[0].mxu0
        %302 = vmatprep.mubr.f32.mxu0 %v167
        %303 = vmatmul.mubr.f32.gmra.mrb[0].mxu0 %v166
        %v304 = vpop.f32.mrb[0].mxu0
        %v305 = vadd.f32 0.0, %v304
        %v306 = vpop.f32.mrb[0].mxu0
        %307 = vmatprep.mubr.f32.mxu0 %v169
        %308 = vmatmul.mubr.f32.gmra.mrb[0].mxu0 %v168
        %v309 = vpop.f32.mrb[0].mxu0
        %v310 = vadd.f32 0.0, %v309
        %v311 = vpop.f32.mrb[0].mxu0
        %312 = vmatprep.mubr.f32.mxu0 %v171
        %313 = vmatmul.mubr.f32.gmra.mrb[0].mxu0 %v170
        %v314 = vpop.f32.mrb[0].mxu0
        %v315 = vadd.f32 0.0, %v314
        %v316 = vpop.f32.mrb[0].mxu0
        %317 = vmatprep.mubr.f32.mxu0 %v173
        %318 = vmatmul.mubr.f32.gmra.mrb[0].mxu0 %v172
        %v319 = vpop.f32.mrb[0].mxu0
        %v320 = vadd.f32 0.0, %v319
        %v321 = vpop.f32.mrb[0].mxu0
        %322 = vmatprep.mubr.f32.mxu0 %v175
        %323 = vmatmul.mubr.f32.gmra.mrb[0].mxu0 %v174
        %v324 = vpop.f32.mrb[0].mxu0
        %v325 = vadd.f32 0.0, %v324
        %v326 = vpop.f32.mrb[0].mxu0
        %327 = vmatprep.mubr.f32.mxu0 %v177
        %328 = vmatmul.mubr.f32.gmra.mrb[0].mxu0 %v176
        %v329 = vpop.f32.mrb[0].mxu0
        %v330 = vadd.f32 0.0, %v329
        %v331 = vpop.f32.mrb[0].mxu0
        %332 = vmatprep.mubr.f32.mxu0 %v179
        %333 = vmatmul.mubr.f32.gmra.mrb[0].mxu0 %v178
        %v334 = vpop.f32.mrb[0].mxu0
        %v335 = vadd.f32 0.0, %v334
        %v336 = vpop.f32.mrb[0].mxu0
        %337 = vmatprep.mubr.f32.mxu0 %v181
        %338 = vmatmul.mubr.f32.gmra.mrb[0].mxu0 %v180
        %v339 = vpop.f32.mrb[0].mxu0
        %v340 = vadd.f32 0.0, %v339
        %v341 = vpop.f32.mrb[0].mxu0
        %342 = vmatprep.mubr.f32.mxu0 %v183
        %343 = vmatmul.mubr.f32.gmra.mrb[0].mxu0 %v182
        %v344 = vpop.f32.mrb[0].mxu0
        %v345 = vadd.f32 0.0, %v344
        %v346 = vpop.f32.mrb[0].mxu0
        %347 = vmatprep.mubr.f32.mxu0 %v185
        %348 = vmatmul.mubr.f32.gmra.mrb[0].mxu0 %v184
        %v349 = vpop.f32.mrb[0].mxu0
        %v350 = vadd.f32 0.0, %v349
        %v351 = vpop.f32.mrb[0].mxu0
        %352 = vmatprep.mubr.f32.mxu0 %v187
        %353 = vmatmul.mubr.f32.gmra.mrb[0].mxu0 %v186
        %v354 = vpop.f32.mrb[0].mxu0
        %v355 = vadd.f32 0.0, %v354
        %v356 = vpop.f32.mrb[0].mxu0
        %357 = vmatprep.mubr.f32.mxu0 %v189
        %358 = vmatmul.mubr.f32.gmra.mrb[0].mxu0 %v188
        %v359 = vpop.f32.mrb[0].mxu0
        %v360 = vadd.f32 0.0, %v359
        %v361 = vpop.f32.mrb[0].mxu0
        %362 = vmatprep.mubr.f32.mxu0 %v191
        %363 = vmatmul.mubr.f32.gmra.mrb[0].mxu0 %v190
        %v364 = vpop.f32.mrb[0].mxu0
        %v365 = vadd.f32 0.0, %v364
        %v366 = vpop.f32.mrb[0].mxu0
        %367 = vmatprep.mubr.f32.mxu0 %v193
        %368 = vmatmul.mubr.f32.gmra.mrb[0].mxu0 %v192
        %v369 = vpop.f32.mrb[0].mxu0
        %v370 = vadd.f32 0.0, %v369
        %v371 = vpop.f32.mrb[0].mxu0
        %372 = vmatprep.mubr.f32.mxu0 %v195
        %373 = vmatmul.mubr.f32.gmra.mrb[0].mxu0 %v194
        %v374 = vpop.f32.mrb[0].mxu0
        %v375 = vadd.f32 0.0, %v374
        %v376 = vpop.f32.mrb[0].mxu0
        %377 = vdwg.mxu0
        %v378 = vadd.f32 %v217, %v300
        %v379 = vadd.f32 %v218, %v305
        %v380 = vadd.f32 %v219, %v310
        %v381 = vadd.f32 %v220, %v315
        %v382 = vadd.f32 %v221, %v320
        %v383 = vadd.f32 %v222, %v325
        %v384 = vadd.f32 %v223, %v330
        %v385 = vadd.f32 %v224, %v335
        %v386 = vadd.f32 %v225, %v340
        %v387 = vadd.f32 %v226, %v345
        %v388 = vadd.f32 %v227, %v350
        %v389 = vadd.f32 %v228, %v355
        %v390 = vadd.f32 %v229, %v360
        %v391 = vadd.f32 %v230, %v365
        %v392 = vadd.f32 %v231, %v370
        %v393 = vadd.f32 %v232, %v375
        %394 = vst [vmem:[%s160] sm:$0xff] %v378
        %395 = vst [vmem:[%s160 + $0x8] sm:$0xff] %v379
        %396 = vst [vmem:[%s160 + $0x10] sm:$0xff] %v380
        %397 = vst [vmem:[%s160 + $0x18] sm:$0xff] %v381
        %398 = vst [vmem:[%s160 + $0x20] sm:$0xff] %v382
        %399 = vst [vmem:[%s160 + $0x28] sm:$0xff] %v383
        %400 = vst [vmem:[%s160 + $0x30] sm:$0xff] %v384
        %401 = vst [vmem:[%s160 + $0x38] sm:$0xff] %v385
        %402 = vst [vmem:[%s160 + $0x40] sm:$0xff] %v386
        %403 = vst [vmem:[%s160 + $0x48] sm:$0xff] %v387
        %404 = vst [vmem:[%s160 + $0x50] sm:$0xff] %v388
        %405 = vst [vmem:[%s160 + $0x58] sm:$0xff] %v389
        %406 = vst [vmem:[%s160 + $0x60] sm:$0xff] %v390
        %407 = vst [vmem:[%s160 + $0x68] sm:$0xff] %v391
        %408 = vst [vmem:[%s160 + $0x70] sm:$0xff] %v392
        %409 = vst [vmem:[%s160 + $0x78] sm:$0xff] %v393
        %s410 = sand.u32 %s78, 1
        %s411 = scalar_lea.sflag [#allocation7], %s410
        %s412 = sand.u32 %s78, 1
        %s413 = smul.addr %s412, 128
        %s414 = scalar_lea.vmem [#allocation8], %s413
        // Predicated region
        $region33: #{tpu_custom_call.1} parent=23 // pred_check
          %p415 = pneg %p88
        $region34: #{tpu_custom_call.1} parent=23 // pred_check_branch
          %417 = sbr.rel (%p415) target = $region36
        $region35: #{tpu_custom_call.1} parent=23 // pred_region
          %s418 = sld [smem:[#allocation3 + %s33]]
          %s419 = smul.u32 16, %s32
          %s421 = ssub.s32 2048, 2048
          %422 = vsyncadd %s411, %s421
          %s423 = smul.addr %s418, 16
          %s424 = sadd.s32 %s419, %s423
          %s425 = smul.addr %s424, 128
          %s426 = scalar_lea.hbm %s3, %s425
          %s427 = sshll.u32 %s414, 4
          %s428 = int_to_ptr.vmem [resolvable:$true] %s427
          %433 = dma.vmem_to_hbm [thread:$0]  %s428, 2048, %s426, %s411, 128, 128, 8
        $region36: #{tpu_custom_call.1} parent=23 // pred_fallthru
          _
      $region24: #{tpu_custom_call.1} parent=5 // pred_fallthru
        _
      %p434 = scmp.le.s32.totalorder 2, %s23
      // Predicated region
      $region37: #{tpu_custom_call.1} parent=5 // pred_check
        %p435 = pneg %p434
      $region38: #{tpu_custom_call.1} parent=5 // pred_check_branch
        %437 = sbr.rel (%p435) target = $region40
      $region39: #{tpu_custom_call.1} parent=5 // pred_region
        %s438 = ssub.s32 %s23, 2
        // Predicated region
        $region41: #{tpu_custom_call.1} parent=39 // pred_check
          %p439 = pneg %p94
        $region42: #{tpu_custom_call.1} parent=39 // pred_check_branch
          %441 = sbr.rel (%p439) target = $region44
        $region43: #{tpu_custom_call.1} parent=39 // pred_region
          %s442 = sand.u32 %s79, 1
          %s443 = scalar_lea.sflag [#allocation7], %s442
          %s444 = sand.u32 %s79, 1
          %s445 = smul.addr %s444, 128
          %s446 = scalar_lea.vmem [#allocation8], %s445
          %447 = dma.done %s443, 2048
        $region44: #{tpu_custom_call.1} parent=39 // pred_fallthru
          _
      $region40: #{tpu_custom_call.1} parent=5 // pred_fallthru
        _
    $region6: #{tpu_custom_call.1} parent=1 // loop_footer
      %s27 = sadd.s32 1, %s23
    $region7: #{tpu_custom_call.1} parent=1 // loop_footer_branch
      %22 = sbr.rel target = $region3
    $region8: #{tpu_custom_call.1} parent=1 // loop_exit
      _
    %448 = vsyncpa [#allocation6], 1
    %s449 = scalar_lea.sflag [#allocation6], 1
    %450 = vsyncpa %s449, 1
    %451 = vsyncpa [#allocation7], 1
    %s452 = scalar_lea.sflag [#allocation7], 1
    %453 = vsyncpa %s452, 1

</llo_original>
